<compile_context>
chip_gen: v7x
topology: tpu7x:2x2x1
jax: 0.10.0
libtpu: 0.0.40
codegen_flags: <defaults>
</compile_context>

<pallas_src>
import jax
import jax.numpy as jnp
from jax.experimental import pallas as pl
from jax.experimental.pallas import tpu as pltpu


# Logical (PyTorch) layer widths: fc1..fc5, out
LAYER_DIMS = [24, 32, 100, 100, 32, 6]
# Lane-friendly padded widths used inside the kernel. Final layer padded only
# to 8 (== full output-array width) instead of a wasteful 128-wide slab.
PADDED_DIMS = [32, 32, 128, 128, 32, 8]
OUT_DIM = LAYER_DIMS[-1]
OUT_PAD = PADDED_DIMS[-1]


def _round_up(n, m):
    return ((n + m - 1) // m) * m


def _pick_batch_tile(B):
    """Batch tile (rows per grid step)."""
    if B < 512:
        # Tiny batch: one grid step, sublane-aligned.
        return _round_up(max(B, 8), 8)
    # Large batch: 512..4096-row tiles, targeting >= ~6 grid steps so v7x's two
    # TensorCores each get several steps (megacore split + DMA/compute overlap)
    # while still amortizing the ~0.35us fixed per-step overhead.
    tb = _round_up(-(-B // 6), 512)
    return max(512, min(4096, tb))


def _vmem_limit_bytes():
    """Per-generation scoped-VMEM limit (v7x has 64 MiB physical, v5e/v6e 128)."""
    cap = 64 << 20
    try:
        info = pltpu.get_tpu_info()
        cap = int(getattr(info, "vmem_capacity_bytes", cap) or cap)
    except Exception:
        pass
    # 3/4 of physical, capped at 96 MiB: -> 48 MiB on v7x, 96 MiB on v5e/v6e.
    return int(min(96 << 20, (cap * 3) // 4))


def mlp_kernel(x_ref,
               w1, b1, w2, b2, w3, b3, w4, b4, w5, b5, w6, b6,
               o_ref):
    def dense(h_bf16, w_ref, b_ref, relu):
        # bf16 x bf16 MXU matmul with forced f32 accumulation; the bias-add /
        # ReLU epilogue stays in f32 (v5e-safe), then a single downcast feeds
        # the next layer's matmul.
        y = jnp.dot(h_bf16, w_ref[...], preferred_element_type=jnp.float32)
        y = y + b_ref[...]
        if relu:
            y = jnp.maximum(y, 0.0)
        return y

    h = x_ref[...]                                   # already bf16 (wrapper cast)
    h = dense(h, w1, b1, True).astype(jnp.bfloat16)
    h = dense(h, w2, b2, True).astype(jnp.bfloat16)
    h = dense(h, w3, b3, True).astype(jnp.bfloat16)
    h = dense(h, w4, b4, True).astype(jnp.bfloat16)
    h = dense(h, w5, b5, True).astype(jnp.bfloat16)
    y = dense(h, w6, b6, False)                      # f32 logits, 8 lanes wide
    o_ref[...] = y.astype(o_ref.dtype)


def init_params(key, n_features):
    """Unpadded params, torch.nn.Linear-style init: U(-1/sqrt(fan_in), +...).

    Stored directly in (in, out) layout (== transpose of torch's (out, in))."""
    params = []
    in_dim = n_features
    for out_dim in LAYER_DIMS:
        key, kw, kb = jax.random.split(key, 3)
        bound = 1.0 / jnp.sqrt(jnp.float32(in_dim))
        w = jax.random.uniform(kw, (in_dim, out_dim), jnp.float32, -bound, bound)
        b = jax.random.uniform(kb, (out_dim,), jnp.float32, -bound, bound)
        params.append((w, b))
        in_dim = out_dim
    return params


def prepare_params(params):
    """One-time setup: zero-pad to lane-friendly widths, cast weights to bf16."""
    prepared = []
    in_pad = params[0][0].shape[0]  # n_features stays unpadded (contraction only)
    for (w, b), out_pad in zip(params, PADDED_DIMS):
        in_dim, out_dim = w.shape
        w_p = jnp.zeros((in_pad, out_pad), jnp.float32).at[:in_dim, :out_dim].set(w)
        b_p = jnp.zeros((1, out_pad), jnp.float32).at[0, :out_dim].set(b)
        prepared.append((w_p.astype(jnp.bfloat16), b_p))  # biases stay f32
        in_pad = out_pad
    return prepared


def mlp_forward(x, prepared_params):
    """Forward pass: flatten(start_dim=1) then the fused Pallas MLP kernel."""
    B = x.shape[0]
    # bf16 streaming: halves input HBM/DMA bytes; matmuls consume bf16 anyway.
    x2d = x.reshape(B, -1).astype(jnp.bfloat16)
    n_features = x2d.shape[1]

    TB = _pick_batch_tile(B)
    B_pad = _round_up(B, TB)
    if B_pad != B:
        x2d = jnp.pad(x2d, ((0, B_pad - B), (0, 0)))

    flat_params = []
    for w, b in prepared_params:
        flat_params.extend([w, b])

    grid = (B_pad // TB,)

    # x tile streams per grid step; weights/biases use constant index_maps so
    # they are grid-invariant VMEM residents (DMA'd once, no per-step re-fetch).
    in_specs = [pl.BlockSpec((TB, n_features), lambda i: (i, 0))]
    for p in flat_params:
        in_specs.append(pl.BlockSpec(p.shape, lambda i: (0, 0)))
    out_specs = pl.BlockSpec((TB, OUT_PAD), lambda i: (i, 0))

    # Advisory cost estimate reflecting the real (bf16-in / 8-wide-out) traffic.
    flops = 2 * B_pad * sum(int(w.shape[0]) * int(w.shape[1])
                            for w, _ in prepared_params)
    param_bytes = sum(int(w.size) * w.dtype.itemsize + int(b.size) * b.dtype.itemsize
                      for w, b in prepared_params)
    bytes_accessed = (int(x2d.size) * x2d.dtype.itemsize
                      + B_pad * OUT_PAD * 4
                      + param_bytes)

    out = pl.pallas_call(
        mlp_kernel,
        out_shape=jax.ShapeDtypeStruct((B_pad, OUT_PAD), jnp.float32),
        grid=grid,
        in_specs=in_specs,
        out_specs=out_specs,
        compiler_params=pltpu.CompilerParams(
            dimension_semantics=("parallel",),        # megacore split on v7x
            vmem_limit_bytes=_vmem_limit_bytes()),    # per-generation headroom
        cost_estimate=pl.CostEstimate(
            flops=flops, transcendentals=0, bytes_accessed=bytes_accessed),
    )(x2d, *flat_params)

    return out[:B, :OUT_DIM]


def reference_forward(x, params):
    """Pure-JAX reference emulating the kernel's bf16-in / f32-accum numerics."""
    h = x.reshape(x.shape[0], -1).astype(jnp.bfloat16)
    for i, (w, b) in enumerate(params):
        y = jnp.dot(h, w.astype(jnp.bfloat16),
                    preferred_element_type=jnp.float32) + b
        if i < len(params) - 1:
            h = jnp.maximum(y, 0.0).astype(jnp.bfloat16)
        else:
            return y


if __name__ == "__main__":
    key = jax.random.PRNGKey(0)
    kx, kp = jax.random.split(key)

    # Small input consistent with flatten(start_dim=1): (B=2, 4, 4) -> 16 features.
    x = jax.random.normal(kx, (2, 4, 4), jnp.float32)
    n_features = 4 * 4

    params = init_params(kp, n_features)
    prepared = prepare_params(params)

    out = jax.block_until_ready(mlp_forward(x, prepared))
    ref = reference_forward(x, params)
    assert out.shape == (2, 6), out.shape
    assert jnp.allclose(out, ref, atol=1e-2, rtol=1e-2), "mismatch (small batch)"

    # Larger batch exercises the batch grid, padding, and the parallel axis.
    xb = jax.random.normal(kx, (1000, 4, 4), jnp.float32)
    outb = jax.block_until_ready(mlp_forward(xb, prepared))
    refb = reference_forward(xb, params)
    assert outb.shape == (1000, 6), outb.shape
    assert jnp.allclose(outb, refb, atol=1e-2, rtol=1e-2), "mismatch (large batch)"

    print("KERNEL_OK")
</pallas_src>

<mosaic_0001>
module attributes {stable_mosaic.version = 11 : i64} {
  func.func @mlp_kernel(%arg0: i32, %arg1: memref<8x16xbf16, #tpu.memory_space<vmem>>, %arg2: memref<16x32xbf16, #tpu.memory_space<vmem>>, %arg3: memref<1x32xf32, #tpu.memory_space<vmem>>, %arg4: memref<32x32xbf16, #tpu.memory_space<vmem>>, %arg5: memref<1x32xf32, #tpu.memory_space<vmem>>, %arg6: memref<32x128xbf16, #tpu.memory_space<vmem>>, %arg7: memref<1x128xf32, #tpu.memory_space<vmem>>, %arg8: memref<128x128xbf16, #tpu.memory_space<vmem>>, %arg9: memref<1x128xf32, #tpu.memory_space<vmem>>, %arg10: memref<128x32xbf16, #tpu.memory_space<vmem>>, %arg11: memref<1x32xf32, #tpu.memory_space<vmem>>, %arg12: memref<32x8xbf16, #tpu.memory_space<vmem>>, %arg13: memref<1x8xf32, #tpu.memory_space<vmem>>, %arg14: memref<8x8xf32, #tpu.memory_space<vmem>>) attributes {dimension_semantics = [#tpu.dimension_semantics<parallel>], iteration_bounds = array<i64: 1>, scalar_prefetch = 0 : i64, scratch_operands = 0 : i64, tpu.core_type = #tpu.core_type<tc>, window_params = [{transform_indices = @transform_0, window_bounds = array<i64: 8, 16>}, {pipeline_mode = #tpu.pipeline_mode<synchronous>, transform_indices = @transform_1, window_bounds = array<i64: 16, 32>}, {pipeline_mode = #tpu.pipeline_mode<synchronous>, transform_indices = @transform_2, window_bounds = array<i64: 1, 32>}, {pipeline_mode = #tpu.pipeline_mode<synchronous>, transform_indices = @transform_3, window_bounds = array<i64: 32, 32>}, {pipeline_mode = #tpu.pipeline_mode<synchronous>, transform_indices = @transform_4, window_bounds = array<i64: 1, 32>}, {pipeline_mode = #tpu.pipeline_mode<synchronous>, transform_indices = @transform_5, window_bounds = array<i64: 32, 128>}, {pipeline_mode = #tpu.pipeline_mode<synchronous>, transform_indices = @transform_6, window_bounds = array<i64: 1, 128>}, {pipeline_mode = #tpu.pipeline_mode<synchronous>, transform_indices = @transform_7, window_bounds = array<i64: 128, 128>}, {pipeline_mode = #tpu.pipeline_mode<synchronous>, transform_indices = @transform_8, window_bounds = array<i64: 1, 128>}, {pipeline_mode = #tpu.pipeline_mode<synchronous>, transform_indices = @transform_9, window_bounds = array<i64: 128, 32>}, {pipeline_mode = #tpu.pipeline_mode<synchronous>, transform_indices = @transform_10, window_bounds = array<i64: 1, 32>}, {pipeline_mode = #tpu.pipeline_mode<synchronous>, transform_indices = @transform_11, window_bounds = array<i64: 32, 8>}, {pipeline_mode = #tpu.pipeline_mode<synchronous>, transform_indices = @transform_12, window_bounds = array<i64: 1, 8>}, {transform_indices = @transform_13, window_bounds = array<i64: 8, 8>}]} {
    %c0 = arith.constant 0 : index
    %c0_0 = arith.constant 0 : index
    %0 = vector.load %arg1[%c0, %c0_0] : memref<8x16xbf16, #tpu.memory_space<vmem>>, vector<8x16xbf16>
    %c0_1 = arith.constant 0 : index
    %c0_2 = arith.constant 0 : index
    %1 = vector.load %arg2[%c0_1, %c0_2] : memref<16x32xbf16, #tpu.memory_space<vmem>>, vector<16x32xbf16>
    %cst = arith.constant dense<0.000000e+00> : vector<8x32xf32>
    %2 = tpu.matmul %0, %1, %cst {dimension_numbers = #tpu.dot_dimension_numbers<[1], [0], [0], [1], [0, 0, 1, 1], [], []>} : vector<8x16xbf16>, vector<16x32xbf16>, vector<8x32xf32> -> vector<8x32xf32>
    %c0_3 = arith.constant 0 : index
    %c0_4 = arith.constant 0 : index
    %3 = vector.load %arg3[%c0_3, %c0_4] : memref<1x32xf32, #tpu.memory_space<vmem>>, vector<1x32xf32>
    %4 = vector.broadcast %3 : vector<1x32xf32> to vector<8x32xf32>
    %5 = arith.addf %2, %4 : vector<8x32xf32>
    %cst_5 = arith.constant 0.000000e+00 : f32
    %6 = vector.broadcast %cst_5 : f32 to vector<8x32xf32>
    %7 = arith.maximumf %5, %6 : vector<8x32xf32>
    %8 = arith.truncf %7 : vector<8x32xf32> to vector<8x32xbf16>
    %c0_6 = arith.constant 0 : index
    %c0_7 = arith.constant 0 : index
    %9 = vector.load %arg4[%c0_6, %c0_7] : memref<32x32xbf16, #tpu.memory_space<vmem>>, vector<32x32xbf16>
    %cst_8 = arith.constant dense<0.000000e+00> : vector<8x32xf32>
    %10 = tpu.matmul %8, %9, %cst_8 {dimension_numbers = #tpu.dot_dimension_numbers<[1], [0], [0], [1], [0, 0, 1, 1], [], []>} : vector<8x32xbf16>, vector<32x32xbf16>, vector<8x32xf32> -> vector<8x32xf32>
    %c0_9 = arith.constant 0 : index
    %c0_10 = arith.constant 0 : index
    %11 = vector.load %arg5[%c0_9, %c0_10] : memref<1x32xf32, #tpu.memory_space<vmem>>, vector<1x32xf32>
    %12 = vector.broadcast %11 : vector<1x32xf32> to vector<8x32xf32>
    %13 = arith.addf %10, %12 : vector<8x32xf32>
    %cst_11 = arith.constant 0.000000e+00 : f32
    %14 = vector.broadcast %cst_11 : f32 to vector<8x32xf32>
    %15 = arith.maximumf %13, %14 : vector<8x32xf32>
    %16 = arith.truncf %15 : vector<8x32xf32> to vector<8x32xbf16>
    %c0_12 = arith.constant 0 : index
    %c0_13 = arith.constant 0 : index
    %17 = vector.load %arg6[%c0_12, %c0_13] : memref<32x128xbf16, #tpu.memory_space<vmem>>, vector<32x128xbf16>
    %cst_14 = arith.constant dense<0.000000e+00> : vector<8x128xf32>
    %18 = tpu.matmul %16, %17, %cst_14 {dimension_numbers = #tpu.dot_dimension_numbers<[1], [0], [0], [1], [0, 0, 1, 1], [], []>} : vector<8x32xbf16>, vector<32x128xbf16>, vector<8x128xf32> -> vector<8x128xf32>
    %c0_15 = arith.constant 0 : index
    %c0_16 = arith.constant 0 : index
    %19 = vector.load %arg7[%c0_15, %c0_16] : memref<1x128xf32, #tpu.memory_space<vmem>>, vector<1x128xf32>
    %20 = vector.broadcast %19 : vector<1x128xf32> to vector<8x128xf32>
    %21 = arith.addf %18, %20 : vector<8x128xf32>
    %cst_17 = arith.constant 0.000000e+00 : f32
    %22 = vector.broadcast %cst_17 : f32 to vector<8x128xf32>
    %23 = arith.maximumf %21, %22 : vector<8x128xf32>
    %24 = arith.truncf %23 : vector<8x128xf32> to vector<8x128xbf16>
    %c0_18 = arith.constant 0 : index
    %c0_19 = arith.constant 0 : index
    %25 = vector.load %arg8[%c0_18, %c0_19] : memref<128x128xbf16, #tpu.memory_space<vmem>>, vector<128x128xbf16>
    %cst_20 = arith.constant dense<0.000000e+00> : vector<8x128xf32>
    %26 = tpu.matmul %24, %25, %cst_20 {dimension_numbers = #tpu.dot_dimension_numbers<[1], [0], [0], [1], [0, 0, 1, 1], [], []>} : vector<8x128xbf16>, vector<128x128xbf16>, vector<8x128xf32> -> vector<8x128xf32>
    %c0_21 = arith.constant 0 : index
    %c0_22 = arith.constant 0 : index
    %27 = vector.load %arg9[%c0_21, %c0_22] : memref<1x128xf32, #tpu.memory_space<vmem>>, vector<1x128xf32>
    %28 = vector.broadcast %27 : vector<1x128xf32> to vector<8x128xf32>
    %29 = arith.addf %26, %28 : vector<8x128xf32>
    %cst_23 = arith.constant 0.000000e+00 : f32
    %30 = vector.broadcast %cst_23 : f32 to vector<8x128xf32>
    %31 = arith.maximumf %29, %30 : vector<8x128xf32>
    %32 = arith.truncf %31 : vector<8x128xf32> to vector<8x128xbf16>
    %c0_24 = arith.constant 0 : index
    %c0_25 = arith.constant 0 : index
    %33 = vector.load %arg10[%c0_24, %c0_25] : memref<128x32xbf16, #tpu.memory_space<vmem>>, vector<128x32xbf16>
    %cst_26 = arith.constant dense<0.000000e+00> : vector<8x32xf32>
    %34 = tpu.matmul %32, %33, %cst_26 {dimension_numbers = #tpu.dot_dimension_numbers<[1], [0], [0], [1], [0, 0, 1, 1], [], []>} : vector<8x128xbf16>, vector<128x32xbf16>, vector<8x32xf32> -> vector<8x32xf32>
    %c0_27 = arith.constant 0 : index
    %c0_28 = arith.constant 0 : index
    %35 = vector.load %arg11[%c0_27, %c0_28] : memref<1x32xf32, #tpu.memory_space<vmem>>, vector<1x32xf32>
    %36 = vector.broadcast %35 : vector<1x32xf32> to vector<8x32xf32>
    %37 = arith.addf %34, %36 : vector<8x32xf32>
    %cst_29 = arith.constant 0.000000e+00 : f32
    %38 = vector.broadcast %cst_29 : f32 to vector<8x32xf32>
    %39 = arith.maximumf %37, %38 : vector<8x32xf32>
    %40 = arith.truncf %39 : vector<8x32xf32> to vector<8x32xbf16>
    %c0_30 = arith.constant 0 : index
    %c0_31 = arith.constant 0 : index
    %41 = vector.load %arg12[%c0_30, %c0_31] : memref<32x8xbf16, #tpu.memory_space<vmem>>, vector<32x8xbf16>
    %cst_32 = arith.constant dense<0.000000e+00> : vector<8x8xf32>
    %42 = tpu.matmul %40, %41, %cst_32 {dimension_numbers = #tpu.dot_dimension_numbers<[1], [0], [0], [1], [0, 0, 1, 1], [], []>} : vector<8x32xbf16>, vector<32x8xbf16>, vector<8x8xf32> -> vector<8x8xf32>
    %c0_33 = arith.constant 0 : index
    %c0_34 = arith.constant 0 : index
    %43 = vector.load %arg13[%c0_33, %c0_34] : memref<1x8xf32, #tpu.memory_space<vmem>>, vector<1x8xf32>
    %44 = vector.broadcast %43 : vector<1x8xf32> to vector<8x8xf32>
    %45 = arith.addf %42, %44 : vector<8x8xf32>
    %c0_35 = arith.constant 0 : index
    %c0_36 = arith.constant 0 : index
    %46 = vector.load %arg14[%c0_35, %c0_36] : memref<8x8xf32, #tpu.memory_space<vmem>>, vector<8x8xf32>
    tpu.vector_store %arg14[%c0_35, %c0_36], %45 {strides = array<i32>} : memref<8x8xf32, #tpu.memory_space<vmem>>, vector<8x8xf32>,
    return
  }
  func.func @transform_0(%arg0: i32) -> (i32, i32) {
    %c0_i32 = arith.constant 0 : i32
    %c0_i32_0 = arith.constant 0 : i32
    return %arg0, %c0_i32 : i32, i32
  }
  func.func @transform_1(%arg0: i32) -> (i32, i32) {
    %c0_i32 = arith.constant 0 : i32
    %c0_i32_0 = arith.constant 0 : i32
    %c0_i32_1 = arith.constant 0 : i32
    return %c0_i32, %c0_i32_0 : i32, i32
  }
  func.func @transform_2(%arg0: i32) -> (i32, i32) {
    %c0_i32 = arith.constant 0 : i32
    %c0_i32_0 = arith.constant 0 : i32
    %c0_i32_1 = arith.constant 0 : i32
    return %c0_i32, %c0_i32_0 : i32, i32
  }
  func.func @transform_3(%arg0: i32) -> (i32, i32) {
    %c0_i32 = arith.constant 0 : i32
    %c0_i32_0 = arith.constant 0 : i32
    %c0_i32_1 = arith.constant 0 : i32
    return %c0_i32, %c0_i32_0 : i32, i32
  }
  func.func @transform_4(%arg0: i32) -> (i32, i32) {
    %c0_i32 = arith.constant 0 : i32
    %c0_i32_0 = arith.constant 0 : i32
    %c0_i32_1 = arith.constant 0 : i32
    return %c0_i32, %c0_i32_0 : i32, i32
  }
  func.func @transform_5(%arg0: i32) -> (i32, i32) {
    %c0_i32 = arith.constant 0 : i32
    %c0_i32_0 = arith.constant 0 : i32
    %c0_i32_1 = arith.constant 0 : i32
    return %c0_i32, %c0_i32_0 : i32, i32
  }
  func.func @transform_6(%arg0: i32) -> (i32, i32) {
    %c0_i32 = arith.constant 0 : i32
    %c0_i32_0 = arith.constant 0 : i32
    %c0_i32_1 = arith.constant 0 : i32
    return %c0_i32, %c0_i32_0 : i32, i32
  }
  func.func @transform_7(%arg0: i32) -> (i32, i32) {
    %c0_i32 = arith.constant 0 : i32
    %c0_i32_0 = arith.constant 0 : i32
    %c0_i32_1 = arith.constant 0 : i32
    return %c0_i32, %c0_i32_0 : i32, i32
  }
  func.func @transform_8(%arg0: i32) -> (i32, i32) {
    %c0_i32 = arith.constant 0 : i32
    %c0_i32_0 = arith.constant 0 : i32
    %c0_i32_1 = arith.constant 0 : i32
    return %c0_i32, %c0_i32_0 : i32, i32
  }
  func.func @transform_9(%arg0: i32) -> (i32, i32) {
    %c0_i32 = arith.constant 0 : i32
    %c0_i32_0 = arith.constant 0 : i32
    %c0_i32_1 = arith.constant 0 : i32
    return %c0_i32, %c0_i32_0 : i32, i32
  }
  func.func @transform_10(%arg0: i32) -> (i32, i32) {
    %c0_i32 = arith.constant 0 : i32
    %c0_i32_0 = arith.constant 0 : i32
    %c0_i32_1 = arith.constant 0 : i32
    return %c0_i32, %c0_i32_0 : i32, i32
  }
  func.func @transform_11(%arg0: i32) -> (i32, i32) {
    %c0_i32 = arith.constant 0 : i32
    %c0_i32_0 = arith.constant 0 : i32
    %c0_i32_1 = arith.constant 0 : i32
    return %c0_i32, %c0_i32_0 : i32, i32
  }
  func.func @transform_12(%arg0: i32) -> (i32, i32) {
    %c0_i32 = arith.constant 0 : i32
    %c0_i32_0 = arith.constant 0 : i32
    %c0_i32_1 = arith.constant 0 : i32
    return %c0_i32, %c0_i32_0 : i32, i32
  }
  func.func @transform_13(%arg0: i32) -> (i32, i32) {
    %c0_i32 = arith.constant 0 : i32
    %c0_i32_0 = arith.constant 0 : i32
    return %arg0, %c0_i32 : i32, i32
  }
}

</mosaic_0001>

<llo_original>
// kernel: tpu_custom_call.1
$region0: #{tpu_custom_call.1}
  #allocation0 [shape = 'u32[]', space=smem, size = 0x4, offset = 0x4, fixed_abs, tag = 'smem constant byte address 0x4 - core index']
  #allocation1 [shape = 'u32[144,128]{1,0:T(1,128)}', space=vmem, size = 0x12000, scoped, tag = 'internal scratch']
  %s0 = inlined_call_operand.vmem [shape: bf16[8,16], index: 0, kind: input, shape index: {}]
  %s1 = inlined_call_operand.vmem [shape: bf16[16,32], index: 1, kind: input, shape index: {}]
  %s2 = inlined_call_operand.vmem [shape: f32[1,32], index: 2, kind: input, shape index: {}]
  %s3 = inlined_call_operand.vmem [shape: bf16[32,32], index: 3, kind: input, shape index: {}]
  %s4 = inlined_call_operand.vmem [shape: f32[1,32], index: 4, kind: input, shape index: {}]
  %s5 = inlined_call_operand.vmem [shape: bf16[32,128], index: 5, kind: input, shape index: {}]
  %s6 = inlined_call_operand.hbm [shape: f32[1,128], index: 6, kind: input, shape index: {}]
  %s7 = inlined_call_operand.vmem [shape: bf16[128,128], index: 7, kind: input, shape index: {}]
  %s8 = inlined_call_operand.hbm [shape: f32[1,128], index: 8, kind: input, shape index: {}]
  %s9 = inlined_call_operand.vmem [shape: bf16[128,32], index: 9, kind: input, shape index: {}]
  %s10 = inlined_call_operand.vmem [shape: f32[1,32], index: 10, kind: input, shape index: {}]
  %s11 = inlined_call_operand.vmem [shape: bf16[32,8], index: 11, kind: input, shape index: {}]
  %s12 = inlined_call_operand.vmem [shape: f32[1,8], index: 12, kind: input, shape index: {}]
  %s13 = inlined_call_operand.hbm [shape: f32[8,8], index: 13, kind: output, shape index: {}]
  %s14 = sld [smem:[#allocation0]]
  $region70: #{tpu_custom_call.1} parent=0
    _
  %s16 = ssub.s32 1, %s14
  %s17 = scalar_select 0, %s16, %s14
  $region1: #{tpu_custom_call.1} parent=0
    #allocation2 [shape = 'u8[512]{0}', space=vmem, size = 0x400, scoped, tag = 'input window, operand 6, single buffered']
    #allocation3 [shape = 's32[1]{0}', space=sflag, size = 0x4, scoped, tag = 'scoped memory for tpu_custom_call.1']
    #allocation4 [shape = 's32[1]{0}', space=sflag, size = 0x4, scoped, tag = 'scoped memory for tpu_custom_call.1']
    #allocation5 [shape = 'u8[512]{0}', space=vmem, size = 0x400, scoped, tag = 'input window, operand 8, single buffered']
    #allocation6 [shape = 's32[1]{0}', space=sflag, size = 0x4, scoped, tag = 'scoped memory for tpu_custom_call.1']
    #allocation7 [shape = 'u8[4096]{0}', space=vmem, size = 0x1000, scoped, tag = 'output window, operand 0, single buffered']
    %18 = vsyncpa [#allocation3], 0
    %19 = vsyncpa [#allocation6], 0
    %20 = vsyncpa [#allocation4], 0
    // Predicated region
    $region2: #{tpu_custom_call.1} parent=1 // pred_check
      _
    $region3: #{tpu_custom_call.1} parent=1 // pred_check_branch
      %22 = sbr.rel (0) target = $region5
    $region4: #{tpu_custom_call.1} parent=1 // pred_region
      _
    $region5: #{tpu_custom_call.1} parent=1 // pred_fallthru
      _
    // Predicated region
    $region6: #{tpu_custom_call.1} parent=1 // pred_check
      _
    $region7: #{tpu_custom_call.1} parent=1 // pred_check_branch
      %24 = sbr.rel (0) target = $region9
    $region8: #{tpu_custom_call.1} parent=1 // pred_region
      _
    $region9: #{tpu_custom_call.1} parent=1 // pred_fallthru
      _
    // Predicated region
    $region10: #{tpu_custom_call.1} parent=1 // pred_check
      _
    $region11: #{tpu_custom_call.1} parent=1 // pred_check_branch
      %26 = sbr.rel (0) target = $region13
    $region12: #{tpu_custom_call.1} parent=1 // pred_region
      _
    $region13: #{tpu_custom_call.1} parent=1 // pred_fallthru
      _
    // Predicated region
    $region14: #{tpu_custom_call.1} parent=1 // pred_check
      _
    $region15: #{tpu_custom_call.1} parent=1 // pred_check_branch
      %28 = sbr.rel (0) target = $region17
    $region16: #{tpu_custom_call.1} parent=1 // pred_region
      _
    $region17: #{tpu_custom_call.1} parent=1 // pred_fallthru
      _
    // Predicated region
    $region18: #{tpu_custom_call.1} parent=1 // pred_check
      _
    $region19: #{tpu_custom_call.1} parent=1 // pred_check_branch
      %30 = sbr.rel (0) target = $region21
    $region20: #{tpu_custom_call.1} parent=1 // pred_region
      _
    $region21: #{tpu_custom_call.1} parent=1 // pred_fallthru
      _
    // Predicated region
    $region22: #{tpu_custom_call.1} parent=1 // pred_check
      _
    $region23: #{tpu_custom_call.1} parent=1 // pred_check_branch
      %32 = sbr.rel (0) target = $region25
    $region24: #{tpu_custom_call.1} parent=1 // pred_region
      _
    $region25: #{tpu_custom_call.1} parent=1 // pred_fallthru
      _
    // Predicated region
    $region26: #{tpu_custom_call.1} parent=1 // pred_check
      _
    $region27: #{tpu_custom_call.1} parent=1 // pred_check_branch
      %34 = sbr.rel (0) target = $region29
    $region28: #{tpu_custom_call.1} parent=1 // pred_region
      %s36 = ssub.s32 16, 16
      %37 = vsyncadd [#allocation3], %s36
      %s39 = sshll.u32 [#allocation2], 4
      %s40 = int_to_ptr.vmem [resolvable:$true] %s39
      %42 = dma.hbm_to_vmem [thread:$0]  %s6, 16, %s40, [#allocation3]
    $region29: #{tpu_custom_call.1} parent=1 // pred_fallthru
      _
    // Predicated region
    $region30: #{tpu_custom_call.1} parent=1 // pred_check
      _
    $region31: #{tpu_custom_call.1} parent=1 // pred_check_branch
      %44 = sbr.rel (0) target = $region33
    $region32: #{tpu_custom_call.1} parent=1 // pred_region
      _
    $region33: #{tpu_custom_call.1} parent=1 // pred_fallthru
      _
    // Predicated region
    $region34: #{tpu_custom_call.1} parent=1 // pred_check
      _
    $region35: #{tpu_custom_call.1} parent=1 // pred_check_branch
      %46 = sbr.rel (0) target = $region37
    $region36: #{tpu_custom_call.1} parent=1 // pred_region
      %s48 = ssub.s32 16, 16
      %49 = vsyncadd [#allocation6], %s48
      %s51 = sshll.u32 [#allocation5], 4
      %s52 = int_to_ptr.vmem [resolvable:$true] %s51
      %54 = dma.hbm_to_vmem [thread:$0]  %s8, 16, %s52, [#allocation6]
    $region37: #{tpu_custom_call.1} parent=1 // pred_fallthru
      _
    // Predicated region
    $region38: #{tpu_custom_call.1} parent=1 // pred_check
      _
    $region39: #{tpu_custom_call.1} parent=1 // pred_check_branch
      %56 = sbr.rel (0) target = $region41
    $region40: #{tpu_custom_call.1} parent=1 // pred_region
      _
    $region41: #{tpu_custom_call.1} parent=1 // pred_fallthru
      _
    // Predicated region
    $region42: #{tpu_custom_call.1} parent=1 // pred_check
      _
    $region43: #{tpu_custom_call.1} parent=1 // pred_check_branch
      %58 = sbr.rel (0) target = $region45
    $region44: #{tpu_custom_call.1} parent=1 // pred_region
      _
    $region45: #{tpu_custom_call.1} parent=1 // pred_fallthru
      _
    // Predicated region
    $region46: #{tpu_custom_call.1} parent=1 // pred_check
      _
    $region47: #{tpu_custom_call.1} parent=1 // pred_check_branch
      %60 = sbr.rel (0) target = $region49
    $region48: #{tpu_custom_call.1} parent=1 // pred_region
      _
    $region49: #{tpu_custom_call.1} parent=1 // pred_fallthru
      _
    // Predicated region
    $region50: #{tpu_custom_call.1} parent=1 // pred_check
      _
    $region51: #{tpu_custom_call.1} parent=1 // pred_check_branch
      %62 = sbr.rel (0) target = $region53
    $region52: #{tpu_custom_call.1} parent=1 // pred_region
      _
    $region53: #{tpu_custom_call.1} parent=1 // pred_fallthru
      _
    // Predicated region
    $region54: #{tpu_custom_call.1} parent=1 // pred_check
      _
    $region55: #{tpu_custom_call.1} parent=1 // pred_check_branch
      %64 = sbr.rel (0) target = $region57
    $region56: #{tpu_custom_call.1} parent=1 // pred_region
      %65 = dma.done [#allocation3], 16
    $region57: #{tpu_custom_call.1} parent=1 // pred_fallthru
      _
    // Predicated region
    $region58: #{tpu_custom_call.1} parent=1 // pred_check
      _
    $region59: #{tpu_custom_call.1} parent=1 // pred_check_branch
      %67 = sbr.rel (0) target = $region61
    $region60: #{tpu_custom_call.1} parent=1 // pred_region
      %68 = dma.done [#allocation6], 16
    $region61: #{tpu_custom_call.1} parent=1 // pred_fallthru
      _
    %v70 = vld [vmem:[%s0] sm:$0xf]
    %v71 = vld [vmem:[%s1] sm:$0xf]
    %v72 = vld [vmem:[%s1 + $0x4] sm:$0xf]
    %v73 = vld [vmem:[%s2] sm:$0x1]
    %v75 = vlaneseq
    %v76 = vshrl.u32 %v75, 7
    %v77 = vsub.s32 0, %v76
    %v78 = vrot.slane %v73, %v77
    %v82 = vunpack.c.l.b16 %v71
    %v83 = vunpack.c.l.b16 %v72
    %v84 = vpack.c.b16 %v83, %v82
    %vm86 = vcmask 130048
    %v88 = vsel %vm86, %v70, 0
    %90 = vmatprep.subr.bf16.mxu0 0
    %91 = vmatpush1.bf16.msra.mxu0 %v84
    %92 = vmatprep.subr.bf16.mxu0 0
    %93 = vmatpush1.bf16.msra.mxu0 0
    %94 = vmatprep.subr.bf16.mxu0 0
    %95 = vmatpush1.bf16.msra.mxu0 0
    %96 = vmatprep.subr.bf16.mxu0 0
    %97 = vmatpush1.bf16.msra.mxu0 0
    %98 = vmatprep.subr.bf16.mxu0 0
    %99 = vmatpush1.bf16.msra.mxu0 0
    %100 = vmatprep.subr.bf16.mxu0 0
    %101 = vmatpush1.bf16.msra.mxu0 0
    %102 = vmatprep.subr.bf16.mxu0 0
    %103 = vmatpush1.bf16.msra.mxu0 0
    %104 = vmatprep.subr.bf16.mxu0 0
    %105 = vmatpush1.bf16.msra.mxu0 0
    %106 = vmatprep.subr.bf16.mxu0 0
    %107 = vmatpush1.bf16.msra.mxu0 0
    %108 = vmatprep.subr.bf16.mxu0 0
    %109 = vmatpush1.bf16.msra.mxu0 0
    %110 = vmatprep.subr.bf16.mxu0 0
    %111 = vmatpush1.bf16.msra.mxu0 0
    %112 = vmatprep.subr.bf16.mxu0 0
    %113 = vmatpush1.bf16.msra.mxu0 0
    %114 = vmatprep.subr.bf16.mxu0 0
    %115 = vmatpush1.bf16.msra.mxu0 0
    %116 = vmatprep.subr.bf16.mxu0 0
    %117 = vmatpush1.bf16.msra.mxu0 0
    %118 = vmatprep.subr.bf16.mxu0 0
    %119 = vmatpush1.bf16.msra.mxu0 0
    %120 = vmatprep.subr.bf16.mxu0 0
    %121 = vmatpush1.bf16.msra.mxu0 0
    %122 = vmatprep.mubr.bf16.mxu0 0
    %123 = vmatmul.mubr.bf16.gmra.mrb[0].mxu0 %v88
    %v124 = vpop.f32.mrb[0].mxu0
    %v125 = vadd.f32 %v78, %v124
    %v126 = vpop.f32.mrb[0].mxu0
    %v127 = vpop.f32.mrb[0].mxu0
    %v128 = vpop.f32.mrb[0].mxu0
    %129 = vdwg.mxu0
    %v130 = vmax.f32 %v125, 0.0
    %v131 = vpack.c.bf16 %v130, %v130
    %v132 = vld [vmem:[%s3] sm:$0xf]
    %v133 = vld [vmem:[%s3 + $0x4] sm:$0xf]
    %v134 = vld [vmem:[%s3 + $0x8] sm:$0xf]
    %v135 = vld [vmem:[%s3 + $0xc] sm:$0xf]
    %v136 = vld [vmem:[%s4] sm:$0x1]
    %v138 = vlaneseq
    %v139 = vshrl.u32 %v138, 7
    %v140 = vsub.s32 0, %v139
    %v141 = vrot.slane %v136, %v140
    %v147 = vunpack.c.l.b16 %v132
    %v148 = vunpack.c.l.b16 %v133
    %v149 = vunpack.c.l.b16 %v134
    %v150 = vunpack.c.l.b16 %v135
    %v151 = vpack.c.b16 %v148, %v147
    %v152 = vpack.c.b16 %v150, %v149
    %vm155 = vcmask 261120
    %v157 = vsel %vm155, %v131, 0
    %159 = vmatprep.subr.bf16.mxu0 0
    %160 = vmatpush1.bf16.msra.mxu0 %v151
    %161 = vmatprep.subr.bf16.mxu0 0
    %162 = vmatpush1.bf16.msra.mxu0 %v152
    %163 = vmatprep.subr.bf16.mxu0 0
    %164 = vmatpush1.bf16.msra.mxu0 0
    %165 = vmatprep.subr.bf16.mxu0 0
    %166 = vmatpush1.bf16.msra.mxu0 0
    %167 = vmatprep.subr.bf16.mxu0 0
    %168 = vmatpush1.bf16.msra.mxu0 0
    %169 = vmatprep.subr.bf16.mxu0 0
    %170 = vmatpush1.bf16.msra.mxu0 0
    %171 = vmatprep.subr.bf16.mxu0 0
    %172 = vmatpush1.bf16.msra.mxu0 0
    %173 = vmatprep.subr.bf16.mxu0 0
    %174 = vmatpush1.bf16.msra.mxu0 0
    %175 = vmatprep.subr.bf16.mxu0 0
    %176 = vmatpush1.bf16.msra.mxu0 0
    %177 = vmatprep.subr.bf16.mxu0 0
    %178 = vmatpush1.bf16.msra.mxu0 0
    %179 = vmatprep.subr.bf16.mxu0 0
    %180 = vmatpush1.bf16.msra.mxu0 0
    %181 = vmatprep.subr.bf16.mxu0 0
    %182 = vmatpush1.bf16.msra.mxu0 0
    %183 = vmatprep.subr.bf16.mxu0 0
    %184 = vmatpush1.bf16.msra.mxu0 0
    %185 = vmatprep.subr.bf16.mxu0 0
    %186 = vmatpush1.bf16.msra.mxu0 0
    %187 = vmatprep.subr.bf16.mxu0 0
    %188 = vmatpush1.bf16.msra.mxu0 0
    %189 = vmatprep.subr.bf16.mxu0 0
    %190 = vmatpush1.bf16.msra.mxu0 0
    %191 = vmatprep.mubr.bf16.mxu0 0
    %192 = vmatmul.mubr.bf16.gmra.mrb[0].mxu0 %v157
    %v193 = vpop.f32.mrb[0].mxu0
    %v194 = vadd.f32 %v141, %v193
    %v195 = vpop.f32.mrb[0].mxu0
    %v196 = vpop.f32.mrb[0].mxu0
    %v197 = vpop.f32.mrb[0].mxu0
    %198 = vdwg.mxu0
    %v199 = vmax.f32 %v194, 0.0
    %v200 = vpack.c.bf16 %v199, %v199
    %v201 = vld [vmem:[%s5] sm:$0xf]
    %v202 = vld [vmem:[%s5 + $0x4] sm:$0xf]
    %v203 = vld [vmem:[%s5 + $0x8] sm:$0xf]
    %v204 = vld [vmem:[%s5 + $0xc] sm:$0xf]
    %v205 = vld [vmem:[#allocation2] sm:$0x1]
    %v207 = vlaneseq
    %v208 = vshrl.u32 %v207, 7
    %v209 = vsub.s32 0, %v208
    %v210 = vrot.slane %v205, %v209
    %v216 = vunpack.c.l.b16 %v201
    %v217 = vunpack.c.l.b16 %v202
    %v218 = vunpack.c.l.b16 %v203
    %v219 = vunpack.c.l.b16 %v204
    %v220 = vpack.c.b16 %v217, %v216
    %v221 = vpack.c.b16 %v219, %v218
    %v225 = vsel %vm155, %v200, 0
    %227 = vmatprep.subr.bf16.mxu0 0
    %228 = vmatpush1.bf16.msra.mxu0 %v220
    %229 = vmatprep.subr.bf16.mxu0 0
    %230 = vmatpush1.bf16.msra.mxu0 %v221
    %231 = vmatprep.subr.bf16.mxu0 0
    %232 = vmatpush1.bf16.msra.mxu0 0
    %233 = vmatprep.subr.bf16.mxu0 0
    %234 = vmatpush1.bf16.msra.mxu0 0
    %235 = vmatprep.subr.bf16.mxu0 0
    %236 = vmatpush1.bf16.msra.mxu0 0
    %237 = vmatprep.subr.bf16.mxu0 0
    %238 = vmatpush1.bf16.msra.mxu0 0
    %239 = vmatprep.subr.bf16.mxu0 0
    %240 = vmatpush1.bf16.msra.mxu0 0
    %241 = vmatprep.subr.bf16.mxu0 0
    %242 = vmatpush1.bf16.msra.mxu0 0
    %243 = vmatprep.subr.bf16.mxu0 0
    %244 = vmatpush1.bf16.msra.mxu0 0
    %245 = vmatprep.subr.bf16.mxu0 0
    %246 = vmatpush1.bf16.msra.mxu0 0
    %247 = vmatprep.subr.bf16.mxu0 0
    %248 = vmatpush1.bf16.msra.mxu0 0
    %249 = vmatprep.subr.bf16.mxu0 0
    %250 = vmatpush1.bf16.msra.mxu0 0
    %251 = vmatprep.subr.bf16.mxu0 0
    %252 = vmatpush1.bf16.msra.mxu0 0
    %253 = vmatprep.subr.bf16.mxu0 0
    %254 = vmatpush1.bf16.msra.mxu0 0
    %255 = vmatprep.subr.bf16.mxu0 0
    %256 = vmatpush1.bf16.msra.mxu0 0
    %257 = vmatprep.subr.bf16.mxu0 0
    %258 = vmatpush1.bf16.msra.mxu0 0
    %259 = vmatprep.mubr.bf16.mxu0 0
    %260 = vmatmul.mubr.bf16.gmra.mrb[0].mxu0 %v225
    %v261 = vpop.f32.mrb[0].mxu0
    %v262 = vadd.f32 %v210, %v261
    %v263 = vpop.f32.mrb[0].mxu0
    %v264 = vpop.f32.mrb[0].mxu0
    %v265 = vpop.f32.mrb[0].mxu0
    %266 = vdwg.mxu0
    %v267 = vmax.f32 %v262, 0.0
    %v268 = vpack.c.bf16 %v267, %v267
    %v269 = vld [vmem:[%s7] sm:$0xf]
    %v270 = vld [vmem:[%s7 + $0x4] sm:$0xf]
    %v271 = vld [vmem:[%s7 + $0x8] sm:$0xf]
    %v272 = vld [vmem:[%s7 + $0xc] sm:$0xf]
    %v273 = vld [vmem:[%s7 + $0x10] sm:$0xf]
    %v274 = vld [vmem:[%s7 + $0x14] sm:$0xf]
    %v275 = vld [vmem:[%s7 + $0x18] sm:$0xf]
    %v276 = vld [vmem:[%s7 + $0x1c] sm:$0xf]
    %v277 = vld [vmem:[%s7 + $0x20] sm:$0xf]
    %v278 = vld [vmem:[%s7 + $0x24] sm:$0xf]
    %v279 = vld [vmem:[%s7 + $0x28] sm:$0xf]
    %v280 = vld [vmem:[%s7 + $0x2c] sm:$0xf]
    %v281 = vld [vmem:[%s7 + $0x30] sm:$0xf]
    %v282 = vld [vmem:[%s7 + $0x34] sm:$0xf]
    %v283 = vld [vmem:[%s7 + $0x38] sm:$0xf]
    %v284 = vld [vmem:[%s7 + $0x3c] sm:$0xf]
    %v285 = vld [vmem:[#allocation5] sm:$0x1]
    %v287 = vlaneseq
    %v288 = vshrl.u32 %v287, 7
    %v289 = vsub.s32 0, %v288
    %v290 = vrot.slane %v285, %v289
    %v308 = vunpack.c.l.b16 %v269
    %v309 = vunpack.c.l.b16 %v270
    %v310 = vunpack.c.l.b16 %v271
    %v311 = vunpack.c.l.b16 %v272
    %v312 = vunpack.c.l.b16 %v273
    %v313 = vunpack.c.l.b16 %v274
    %v314 = vunpack.c.l.b16 %v275
    %v315 = vunpack.c.l.b16 %v276
    %v316 = vunpack.c.l.b16 %v277
    %v317 = vunpack.c.l.b16 %v278
    %v318 = vunpack.c.l.b16 %v279
    %v319 = vunpack.c.l.b16 %v280
    %v320 = vunpack.c.l.b16 %v281
    %v321 = vunpack.c.l.b16 %v282
    %v322 = vunpack.c.l.b16 %v283
    %v323 = vunpack.c.l.b16 %v284
    %v324 = vpack.c.b16 %v309, %v308
    %v325 = vpack.c.b16 %v311, %v310
    %v326 = vpack.c.b16 %v313, %v312
    %v327 = vpack.c.b16 %v315, %v314
    %v328 = vpack.c.b16 %v317, %v316
    %v329 = vpack.c.b16 %v319, %v318
    %v330 = vpack.c.b16 %v321, %v320
    %v331 = vpack.c.b16 %v323, %v322
    %340 = vmatprep.subr.bf16.mxu0 0
    %341 = vmatpush1.bf16.msra.mxu0 %v324
    %342 = vmatprep.subr.bf16.mxu0 0
    %343 = vmatpush1.bf16.msra.mxu0 %v325
    %344 = vmatprep.subr.bf16.mxu0 0
    %345 = vmatpush1.bf16.msra.mxu0 %v326
    %346 = vmatprep.subr.bf16.mxu0 0
    %347 = vmatpush1.bf16.msra.mxu0 %v327
    %348 = vmatprep.subr.bf16.mxu0 0
    %349 = vmatpush1.bf16.msra.mxu0 %v328
    %350 = vmatprep.subr.bf16.mxu0 0
    %351 = vmatpush1.bf16.msra.mxu0 %v329
    %352 = vmatprep.subr.bf16.mxu0 0
    %353 = vmatpush1.bf16.msra.mxu0 %v330
    %354 = vmatprep.subr.bf16.mxu0 0
    %355 = vmatpush1.bf16.msra.mxu0 %v331
    %356 = vmatprep.subr.bf16.mxu0 0
    %357 = vmatpush1.bf16.msra.mxu0 0
    %358 = vmatprep.subr.bf16.mxu0 0
    %359 = vmatpush1.bf16.msra.mxu0 0
    %360 = vmatprep.subr.bf16.mxu0 0
    %361 = vmatpush1.bf16.msra.mxu0 0
    %362 = vmatprep.subr.bf16.mxu0 0
    %363 = vmatpush1.bf16.msra.mxu0 0
    %364 = vmatprep.subr.bf16.mxu0 0
    %365 = vmatpush1.bf16.msra.mxu0 0
    %366 = vmatprep.subr.bf16.mxu0 0
    %367 = vmatpush1.bf16.msra.mxu0 0
    %368 = vmatprep.subr.bf16.mxu0 0
    %369 = vmatpush1.bf16.msra.mxu0 0
    %370 = vmatprep.subr.bf16.mxu0 0
    %371 = vmatpush1.bf16.msra.mxu0 0
    %372 = vmatprep.mubr.bf16.mxu0 0
    %373 = vmatmul.mubr.bf16.gmra.mrb[0].mxu0 %v268
    %v374 = vpop.f32.mrb[0].mxu0
    %v375 = vadd.f32 %v290, %v374
    %v376 = vpop.f32.mrb[0].mxu0
    %v377 = vpop.f32.mrb[0].mxu0
    %v378 = vpop.f32.mrb[0].mxu0
    %379 = vdwg.mxu0
    %v380 = vmax.f32 %v375, 0.0
    %v381 = vpack.c.bf16 %v380, %v380
    %v382 = vld [vmem:[%s9] sm:$0xf]
    %v383 = vld [vmem:[%s9 + $0x4] sm:$0xf]
    %v384 = vld [vmem:[%s9 + $0x8] sm:$0xf]
    %v385 = vld [vmem:[%s9 + $0xc] sm:$0xf]
    %v386 = vld [vmem:[%s9 + $0x10] sm:$0xf]
    %v387 = vld [vmem:[%s9 + $0x14] sm:$0xf]
    %v388 = vld [vmem:[%s9 + $0x18] sm:$0xf]
    %v389 = vld [vmem:[%s9 + $0x1c] sm:$0xf]
    %v390 = vld [vmem:[%s9 + $0x20] sm:$0xf]
    %v391 = vld [vmem:[%s9 + $0x24] sm:$0xf]
    %v392 = vld [vmem:[%s9 + $0x28] sm:$0xf]
    %v393 = vld [vmem:[%s9 + $0x2c] sm:$0xf]
    %v394 = vld [vmem:[%s9 + $0x30] sm:$0xf]
    %v395 = vld [vmem:[%s9 + $0x34] sm:$0xf]
    %v396 = vld [vmem:[%s9 + $0x38] sm:$0xf]
    %v397 = vld [vmem:[%s9 + $0x3c] sm:$0xf]
    %v398 = vld [vmem:[%s10] sm:$0x1]
    %v400 = vlaneseq
    %v401 = vshrl.u32 %v400, 7
    %v402 = vsub.s32 0, %v401
    %v403 = vrot.slane %v398, %v402
    %v421 = vunpack.c.l.b16 %v382
    %v422 = vunpack.c.l.b16 %v383
    %v423 = vunpack.c.l.b16 %v384
    %v424 = vunpack.c.l.b16 %v385
    %v425 = vunpack.c.l.b16 %v386
    %v426 = vunpack.c.l.b16 %v387
    %v427 = vunpack.c.l.b16 %v388
    %v428 = vunpack.c.l.b16 %v389
    %v429 = vunpack.c.l.b16 %v390
    %v430 = vunpack.c.l.b16 %v391
    %v431 = vunpack.c.l.b16 %v392
    %v432 = vunpack.c.l.b16 %v393
    %v433 = vunpack.c.l.b16 %v394
    %v434 = vunpack.c.l.b16 %v395
    %v435 = vunpack.c.l.b16 %v396
    %v436 = vunpack.c.l.b16 %v397
    %v437 = vpack.c.b16 %v422, %v421
    %v438 = vpack.c.b16 %v424, %v423
    %v439 = vpack.c.b16 %v426, %v425
    %v440 = vpack.c.b16 %v428, %v427
    %v441 = vpack.c.b16 %v430, %v429
    %v442 = vpack.c.b16 %v432, %v431
    %v443 = vpack.c.b16 %v434, %v433
    %v444 = vpack.c.b16 %v436, %v435
    %453 = vmatprep.subr.bf16.mxu0 0
    %454 = vmatpush1.bf16.msra.mxu0 %v437
    %455 = vmatprep.subr.bf16.mxu0 0
    %456 = vmatpush1.bf16.msra.mxu0 %v438
    %457 = vmatprep.subr.bf16.mxu0 0
    %458 = vmatpush1.bf16.msra.mxu0 %v439
    %459 = vmatprep.subr.bf16.mxu0 0
    %460 = vmatpush1.bf16.msra.mxu0 %v440
    %461 = vmatprep.subr.bf16.mxu0 0
    %462 = vmatpush1.bf16.msra.mxu0 %v441
    %463 = vmatprep.subr.bf16.mxu0 0
    %464 = vmatpush1.bf16.msra.mxu0 %v442
    %465 = vmatprep.subr.bf16.mxu0 0
    %466 = vmatpush1.bf16.msra.mxu0 %v443
    %467 = vmatprep.subr.bf16.mxu0 0
    %468 = vmatpush1.bf16.msra.mxu0 %v444
    %469 = vmatprep.subr.bf16.mxu0 0
    %470 = vmatpush1.bf16.msra.mxu0 0
    %471 = vmatprep.subr.bf16.mxu0 0
    %472 = vmatpush1.bf16.msra.mxu0 0
    %473 = vmatprep.subr.bf16.mxu0 0
    %474 = vmatpush1.bf16.msra.mxu0 0
    %475 = vmatprep.subr.bf16.mxu0 0
    %476 = vmatpush1.bf16.msra.mxu0 0
    %477 = vmatprep.subr.bf16.mxu0 0
    %478 = vmatpush1.bf16.msra.mxu0 0
    %479 = vmatprep.subr.bf16.mxu0 0
    %480 = vmatpush1.bf16.msra.mxu0 0
    %481 = vmatprep.subr.bf16.mxu0 0
    %482 = vmatpush1.bf16.msra.mxu0 0
    %483 = vmatprep.subr.bf16.mxu0 0
    %484 = vmatpush1.bf16.msra.mxu0 0
    %485 = vmatprep.mubr.bf16.mxu0 0
    %486 = vmatmul.mubr.bf16.gmra.mrb[0].mxu0 %v381
    %v487 = vpop.f32.mrb[0].mxu0
    %v488 = vadd.f32 %v403, %v487
    %v489 = vpop.f32.mrb[0].mxu0
    %v490 = vpop.f32.mrb[0].mxu0
    %v491 = vpop.f32.mrb[0].mxu0
    %492 = vdwg.mxu0
    %v493 = vmax.f32 %v488, 0.0
    %v494 = vpack.c.bf16 %v493, %v493
    %v495 = vld [vmem:[%s11] sm:$0xf]
    %v496 = vld [vmem:[%s11 + $0x4] sm:$0xf]
    %v497 = vld [vmem:[%s11 + $0x8] sm:$0xf]
    %v498 = vld [vmem:[%s11 + $0xc] sm:$0xf]
    %v499 = vld [vmem:[%s12] sm:$0x1]
    %v501 = vlaneseq
    %v502 = vshrl.u32 %v501, 7
    %v503 = vsub.s32 0, %v502
    %v504 = vrot.slane %v499, %v503
    %v510 = vunpack.c.l.b16 %v495
    %v511 = vunpack.c.l.b16 %v496
    %v512 = vunpack.c.l.b16 %v497
    %v513 = vunpack.c.l.b16 %v498
    %v514 = vpack.c.b16 %v511, %v510
    %v515 = vpack.c.b16 %v513, %v512
    %v519 = vsel %vm155, %v494, 0
    %521 = vmatprep.subr.bf16.mxu0 0
    %522 = vmatpush1.bf16.msra.mxu0 %v514
    %523 = vmatprep.subr.bf16.mxu0 0
    %524 = vmatpush1.bf16.msra.mxu0 %v515
    %525 = vmatprep.subr.bf16.mxu0 0
    %526 = vmatpush1.bf16.msra.mxu0 0
    %527 = vmatprep.subr.bf16.mxu0 0
    %528 = vmatpush1.bf16.msra.mxu0 0
    %529 = vmatprep.subr.bf16.mxu0 0
    %530 = vmatpush1.bf16.msra.mxu0 0
    %531 = vmatprep.subr.bf16.mxu0 0
    %532 = vmatpush1.bf16.msra.mxu0 0
    %533 = vmatprep.subr.bf16.mxu0 0
    %534 = vmatpush1.bf16.msra.mxu0 0
    %535 = vmatprep.subr.bf16.mxu0 0
    %536 = vmatpush1.bf16.msra.mxu0 0
    %537 = vmatprep.subr.bf16.mxu0 0
    %538 = vmatpush1.bf16.msra.mxu0 0
    %539 = vmatprep.subr.bf16.mxu0 0
    %540 = vmatpush1.bf16.msra.mxu0 0
    %541 = vmatprep.subr.bf16.mxu0 0
    %542 = vmatpush1.bf16.msra.mxu0 0
    %543 = vmatprep.subr.bf16.mxu0 0
    %544 = vmatpush1.bf16.msra.mxu0 0
    %545 = vmatprep.subr.bf16.mxu0 0
    %546 = vmatpush1.bf16.msra.mxu0 0
    %547 = vmatprep.subr.bf16.mxu0 0
    %548 = vmatpush1.bf16.msra.mxu0 0
    %549 = vmatprep.subr.bf16.mxu0 0
    %550 = vmatpush1.bf16.msra.mxu0 0
    %551 = vmatprep.subr.bf16.mxu0 0
    %552 = vmatpush1.bf16.msra.mxu0 0
    %553 = vmatprep.mubr.bf16.mxu0 0
    %554 = vmatmul.mubr.bf16.gmra.mrb[0].mxu0 %v519
    %v555 = vpop.f32.mrb[0].mxu0
    %v556 = vadd.f32 %v504, %v555
    %v557 = vpop.f32.mrb[0].mxu0
    %v558 = vpop.f32.mrb[0].mxu0
    %v559 = vpop.f32.mrb[0].mxu0
    %560 = vdwg.mxu0
    %vm561 = vcmask 64512
    %562 = vst.msk [vmem:[#allocation7] sm:$0xff] %vm561, %v556
    // Predicated region
    $region62: #{tpu_custom_call.1} parent=1 // pred_check
      _
    $region63: #{tpu_custom_call.1} parent=1 // pred_check_branch
      %564 = sbr.rel (0) target = $region65
    $region64: #{tpu_custom_call.1} parent=1 // pred_region
      %s566 = ssub.s32 128, 128
      %567 = vsyncadd [#allocation4], %s566
      %s569 = sshll.u32 [#allocation7], 4
      %s570 = int_to_ptr.vmem [resolvable:$true] %s569
      %572 = dma.vmem_to_hbm [thread:$0]  %s570, 128, %s13, [#allocation4]
    $region65: #{tpu_custom_call.1} parent=1 // pred_fallthru
      _
    // Predicated region
    $region66: #{tpu_custom_call.1} parent=1 // pred_check
      _
    $region67: #{tpu_custom_call.1} parent=1 // pred_check_branch
      %574 = sbr.rel (0) target = $region69
    $region68: #{tpu_custom_call.1} parent=1 // pred_region
      %575 = dma.done [#allocation4], 128
    $region69: #{tpu_custom_call.1} parent=1 // pred_fallthru
      _
    %576 = vsyncpa [#allocation3], 1
    %577 = vsyncpa [#allocation6], 1
    %578 = vsyncpa [#allocation4], 1

</llo_original>
